<compile_context>
chip_gen: v7x
topology: tpu7x:2x2x1
jax: 0.10.0
libtpu: 0.0.40
codegen_flags: <defaults>
</compile_context>

<pallas_src>
import jax
import jax.numpy as jnp
from jax.experimental import pallas as pl
from jax.experimental.pallas import tpu as pltpu

BN_EPS = 1e-5
TILE_COUT = 128  # lane-dense output tile (multiple of 128 lanes)


def fc_bn_relu_kernel(x_ref, w_ref, gamma_ref, beta_ref, o_ref):
    # Linear (bias-free: the bias cancels under train-mode BN mean subtraction).
    x = x_ref[...]
    w = w_ref[...]
    y = jnp.dot(x, w, preferred_element_type=jnp.float32)  # (N, TILE_COUT) f32

    # BatchNorm1d, training-mode forward (biased variance, eps=1e-5), one-pass
    # statistics: issue both column reductions back-to-back, keep them in f32.
    inv_n = 1.0 / y.shape[0]
    mean = jnp.sum(y, axis=0, keepdims=True) * inv_n          # (1, TILE_COUT)
    meansq = jnp.sum(y * y, axis=0, keepdims=True) * inv_n    # (1, TILE_COUT)
    var = jnp.maximum(meansq - mean * mean, 0.0)

    # Fold gamma into the inverse std so the (N, C) tail is a single
    # broadcasted multiply-add, then ReLU.
    scale = gamma_ref[...] * jax.lax.rsqrt(var + BN_EPS)      # (1, TILE_COUT)
    out = (y - mean) * scale + beta_ref[...]
    o_ref[...] = jnp.maximum(out, 0.0).astype(o_ref.dtype)
    # dropout_rate == 0.0 -> no dropout branch in the reference module.


def fc_module_forward(x, w_t, gamma, beta):
    """x: (N, C_in) f32, w_t: (C_in, C_out), gamma/beta: (1, C_out)."""
    n, c_in = x.shape
    c_out = w_t.shape[1]
    c_pad = pl.cdiv(c_out, TILE_COUT) * TILE_COUT

    if c_pad != c_out:
        pad = c_pad - c_out
        # Zero-padded weight columns give y == 0 for the pad lanes; with
        # gamma=1 / beta=0 pads the BN+ReLU output there stays exactly 0.
        w_t = jnp.pad(w_t, ((0, 0), (0, pad)))
        gamma = jnp.pad(gamma, ((0, 0), (0, pad)), constant_values=1.0)
        beta = jnp.pad(beta, ((0, 0), (0, pad)))

    grid = (c_pad // TILE_COUT,)
    cost = pl.CostEstimate(
        flops=2 * n * c_in * c_pad + 8 * n * c_pad,
        transcendentals=c_pad,
        bytes_accessed=4 * (n * c_in + c_in * c_pad + 2 * c_pad + n * c_pad),
    )

    out_padded = pl.pallas_call(
        fc_bn_relu_kernel,
        out_shape=jax.ShapeDtypeStruct((n, c_pad), jnp.float32),
        grid=grid,
        in_specs=[
            pl.BlockSpec((n, c_in), lambda j: (0, 0)),            # full x resident
            pl.BlockSpec((c_in, TILE_COUT), lambda j: (0, j)),    # weight C_out slice
            pl.BlockSpec((1, TILE_COUT), lambda j: (0, j)),       # gamma slice
            pl.BlockSpec((1, TILE_COUT), lambda j: (0, j)),       # beta slice
        ],
        out_specs=pl.BlockSpec((n, TILE_COUT), lambda j: (0, j)),
        compiler_params=pltpu.CompilerParams(
            dimension_semantics=("parallel",),  # per-feature BN -> exact C_out split
        ),
        cost_estimate=cost,
    )(x, w_t, gamma, beta)

    return out_padded[:, :c_out] if c_pad != c_out else out_padded


if __name__ == "__main__":
    # FCModule(in_channels=32, out_channels=64) applied to a batch of 128 points
    # (>=128 rows so each MXU issue uses a full M tile).
    N, C_IN, C_OUT = 128, 32, 64

    key = jax.random.PRNGKey(0)
    kx, kw, kb = jax.random.split(key, 3)

    x = jax.random.normal(kx, (N, C_IN), dtype=jnp.float32)

    # PyTorch Linear default init: U(-1/sqrt(fan_in), 1/sqrt(fan_in)).
    bound = 1.0 / (C_IN ** 0.5)
    w = jax.random.uniform(kw, (C_OUT, C_IN), minval=-bound, maxval=bound,
                           dtype=jnp.float32)           # torch layout (out, in)
    b = jax.random.uniform(kb, (1, C_OUT), minval=-bound, maxval=bound,
                           dtype=jnp.float32)           # only used by the reference
    w_t = w.T                                           # (C_in, C_out) for x @ w_t

    # BatchNorm1d affine params (default init: gamma=1, beta=0).
    gamma = jnp.ones((1, C_OUT), dtype=jnp.float32)
    beta = jnp.zeros((1, C_OUT), dtype=jnp.float32)

    out = fc_module_forward(x, w_t, gamma, beta)
    out = jax.block_until_ready(out)

    # Pure-JAX reference for the FULL module (bias included) — the bias cancels
    # in train-mode BN, so the bias-free kernel must match it.
    y_ref = x @ w_t + b
    mean = jnp.mean(y_ref, axis=0, keepdims=True)
    var = jnp.mean((y_ref - mean) ** 2, axis=0, keepdims=True)
    ref = jnp.maximum((y_ref - mean) / jnp.sqrt(var + BN_EPS) * gamma + beta, 0.0)

    assert out.shape == (N, C_OUT)
    assert jnp.allclose(out, ref, atol=1e-4, rtol=1e-4), "mismatch vs JAX reference"

    print("KERNEL_OK")
</pallas_src>

<mosaic_0001>
module attributes {stable_mosaic.version = 11 : i64} {
  func.func @fc_bn_relu_kernel(%arg0: i32, %arg1: memref<128x32xf32, #tpu.memory_space<vmem>>, %arg2: memref<32x128xf32, #tpu.memory_space<vmem>>, %arg3: memref<1x128xf32, #tpu.memory_space<vmem>>, %arg4: memref<1x128xf32, #tpu.memory_space<vmem>>, %arg5: memref<128x128xf32, #tpu.memory_space<vmem>>) attributes {dimension_semantics = [#tpu.dimension_semantics<parallel>], iteration_bounds = array<i64: 1>, scalar_prefetch = 0 : i64, scratch_operands = 0 : i64, tpu.core_type = #tpu.core_type<tc>, window_params = [{pipeline_mode = #tpu.pipeline_mode<synchronous>, transform_indices = @transform_0, window_bounds = array<i64: 128, 32>}, {transform_indices = @transform_1, window_bounds = array<i64: 32, 128>}, {transform_indices = @transform_2, window_bounds = array<i64: 1, 128>}, {transform_indices = @transform_3, window_bounds = array<i64: 1, 128>}, {transform_indices = @transform_4, window_bounds = array<i64: 128, 128>}]} {
    %c0 = arith.constant 0 : index
    %c0_0 = arith.constant 0 : index
    %0 = vector.load %arg1[%c0, %c0_0] : memref<128x32xf32, #tpu.memory_space<vmem>>, vector<128x32xf32>
    %c0_1 = arith.constant 0 : index
    %c0_2 = arith.constant 0 : index
    %1 = vector.load %arg2[%c0_1, %c0_2] : memref<32x128xf32, #tpu.memory_space<vmem>>, vector<32x128xf32>
    %cst = arith.constant dense<0.000000e+00> : vector<128x128xf32>
    %2 = tpu.matmul %0, %1, %cst {dimension_numbers = #tpu.dot_dimension_numbers<[1], [0], [0], [1], [0, 0, 1, 1], [], []>} : vector<128x32xf32>, vector<32x128xf32>, vector<128x128xf32> -> vector<128x128xf32>
    %cst_3 = arith.constant dense<0.000000e+00> : vector<128xf32>
    %3 = vector.multi_reduction <add>, %2, %cst_3 [0] : vector<128x128xf32> to vector<128xf32>
    %4 = vector.shape_cast %3 : vector<128xf32> to vector<1x128xf32>
    %cst_4 = arith.constant 7.812500e-03 : f32
    %5 = vector.broadcast %cst_4 : f32 to vector<1x128xf32>
    %6 = arith.mulf %4, %5 : vector<1x128xf32>
    %7 = arith.mulf %2, %2 : vector<128x128xf32>
    %cst_5 = arith.constant dense<0.000000e+00> : vector<128xf32>
    %8 = vector.multi_reduction <add>, %7, %cst_5 [0] : vector<128x128xf32> to vector<128xf32>
    %9 = vector.shape_cast %8 : vector<128xf32> to vector<1x128xf32>
    %cst_6 = arith.constant 7.812500e-03 : f32
    %10 = vector.broadcast %cst_6 : f32 to vector<1x128xf32>
    %11 = arith.mulf %9, %10 : vector<1x128xf32>
    %12 = arith.mulf %6, %6 : vector<1x128xf32>
    %13 = arith.subf %11, %12 : vector<1x128xf32>
    %cst_7 = arith.constant 0.000000e+00 : f32
    %14 = vector.broadcast %cst_7 : f32 to vector<1x128xf32>
    %15 = arith.maximumf %13, %14 : vector<1x128xf32>
    %c0_8 = arith.constant 0 : index
    %c0_9 = arith.constant 0 : index
    %16 = vector.load %arg3[%c0_8, %c0_9] : memref<1x128xf32, #tpu.memory_space<vmem>>, vector<1x128xf32>
    %cst_10 = arith.constant 9.99999974E-6 : f32
    %17 = vector.broadcast %cst_10 : f32 to vector<1x128xf32>
    %18 = arith.addf %15, %17 : vector<1x128xf32>
    %19 = math.rsqrt %18 : vector<1x128xf32>
    %20 = arith.mulf %16, %19 : vector<1x128xf32>
    %21 = vector.broadcast %6 : vector<1x128xf32> to vector<128x128xf32>
    %22 = arith.subf %2, %21 : vector<128x128xf32>
    %23 = vector.broadcast %20 : vector<1x128xf32> to vector<128x128xf32>
    %24 = arith.mulf %22, %23 : vector<128x128xf32>
    %c0_11 = arith.constant 0 : index
    %c0_12 = arith.constant 0 : index
    %25 = vector.load %arg4[%c0_11, %c0_12] : memref<1x128xf32, #tpu.memory_space<vmem>>, vector<1x128xf32>
    %26 = vector.broadcast %25 : vector<1x128xf32> to vector<128x128xf32>
    %27 = arith.addf %24, %26 : vector<128x128xf32>
    %cst_13 = arith.constant 0.000000e+00 : f32
    %28 = vector.broadcast %cst_13 : f32 to vector<128x128xf32>
    %29 = arith.maximumf %27, %28 : vector<128x128xf32>
    %c0_14 = arith.constant 0 : index
    %c0_15 = arith.constant 0 : index
    %30 = vector.load %arg5[%c0_14, %c0_15] : memref<128x128xf32, #tpu.memory_space<vmem>>, vector<128x128xf32>
    tpu.vector_store %arg5[%c0_14, %c0_15], %29 {strides = array<i32>} : memref<128x128xf32, #tpu.memory_space<vmem>>, vector<128x128xf32>,
    return
  }
  func.func @transform_0(%arg0: i32) -> (i32, i32) {
    %c0_i32 = arith.constant 0 : i32
    %c0_i32_0 = arith.constant 0 : i32
    %c0_i32_1 = arith.constant 0 : i32
    return %c0_i32, %c0_i32_0 : i32, i32
  }
  func.func @transform_1(%arg0: i32) -> (i32, i32) {
    %c0_i32 = arith.constant 0 : i32
    %c0_i32_0 = arith.constant 0 : i32
    return %c0_i32, %arg0 : i32, i32
  }
  func.func @transform_2(%arg0: i32) -> (i32, i32) {
    %c0_i32 = arith.constant 0 : i32
    %c0_i32_0 = arith.constant 0 : i32
    return %c0_i32, %arg0 : i32, i32
  }
  func.func @transform_3(%arg0: i32) -> (i32, i32) {
    %c0_i32 = arith.constant 0 : i32
    %c0_i32_0 = arith.constant 0 : i32
    return %c0_i32, %arg0 : i32, i32
  }
  func.func @transform_4(%arg0: i32) -> (i32, i32) {
    %c0_i32 = arith.constant 0 : i32
    %c0_i32_0 = arith.constant 0 : i32
    return %c0_i32, %arg0 : i32, i32
  }
}

</mosaic_0001>

<llo_original>
// kernel: tpu_custom_call.1
$region0: #{tpu_custom_call.1}
  #allocation0 [shape = 'u32[]', space=smem, size = 0x4, offset = 0x4, fixed_abs, tag = 'smem constant byte address 0x4 - core index']
  #allocation1 [shape = 'u32[144,128]{1,0:T(1,128)}', space=vmem, size = 0x12000, scoped, tag = 'internal scratch']
  %s0 = inlined_call_operand.vmem [shape: f32[128,32], index: 0, kind: input, shape index: {}]
  %s1 = inlined_call_operand.vmem [shape: f32[32,128], index: 1, kind: input, shape index: {}]
  %s2 = inlined_call_operand.vmem [shape: f32[1,128], index: 2, kind: input, shape index: {}]
  %s3 = inlined_call_operand.vmem [shape: f32[1,128], index: 3, kind: input, shape index: {}]
  %s4 = inlined_call_operand.hbm [shape: f32[128,128], index: 4, kind: output, shape index: {}]
  %s5 = sld [smem:[#allocation0]]
  $region26: #{tpu_custom_call.1} parent=0
    _
  %s7 = ssub.s32 1, %s5
  %s8 = scalar_select 0, %s7, %s5
  $region1: #{tpu_custom_call.1} parent=0
    #allocation2 [shape = 'u8[65536]{0}', space=vmem, size = 0x10000, scoped, tag = 'output window, operand 0, single buffered']
    #allocation3 [shape = 's32[1]{0}', space=sflag, size = 0x4, scoped, tag = 'scoped memory for tpu_custom_call.1']
    %9 = vsyncpa [#allocation3], 0
    // Predicated region
    $region2: #{tpu_custom_call.1} parent=1 // pred_check
      _
    $region3: #{tpu_custom_call.1} parent=1 // pred_check_branch
      %11 = sbr.rel (0) target = $region5
    $region4: #{tpu_custom_call.1} parent=1 // pred_region
      _
    $region5: #{tpu_custom_call.1} parent=1 // pred_fallthru
      _
    // Predicated region
    $region6: #{tpu_custom_call.1} parent=1 // pred_check
      _
    $region7: #{tpu_custom_call.1} parent=1 // pred_check_branch
      %13 = sbr.rel (0) target = $region9
    $region8: #{tpu_custom_call.1} parent=1 // pred_region
      _
    $region9: #{tpu_custom_call.1} parent=1 // pred_fallthru
      _
    // Predicated region
    $region10: #{tpu_custom_call.1} parent=1 // pred_check
      _
    $region11: #{tpu_custom_call.1} parent=1 // pred_check_branch
      %15 = sbr.rel (0) target = $region13
    $region12: #{tpu_custom_call.1} parent=1 // pred_region
      _
    $region13: #{tpu_custom_call.1} parent=1 // pred_fallthru
      _
    // Predicated region
    $region14: #{tpu_custom_call.1} parent=1 // pred_check
      _
    $region15: #{tpu_custom_call.1} parent=1 // pred_check_branch
      %17 = sbr.rel (0) target = $region17
    $region16: #{tpu_custom_call.1} parent=1 // pred_region
      _
    $region17: #{tpu_custom_call.1} parent=1 // pred_fallthru
      _
    %v18 = vld [vmem:[%s0] sm:$0xff]
    %v19 = vld [vmem:[%s0 + $0x8] sm:$0xff]
    %v20 = vld [vmem:[%s0 + $0x10] sm:$0xff]
    %v21 = vld [vmem:[%s0 + $0x18] sm:$0xff]
    %v22 = vld [vmem:[%s0 + $0x20] sm:$0xff]
    %v23 = vld [vmem:[%s0 + $0x28] sm:$0xff]
    %v24 = vld [vmem:[%s0 + $0x30] sm:$0xff]
    %v25 = vld [vmem:[%s0 + $0x38] sm:$0xff]
    %v26 = vld [vmem:[%s0 + $0x40] sm:$0xff]
    %v27 = vld [vmem:[%s0 + $0x48] sm:$0xff]
    %v28 = vld [vmem:[%s0 + $0x50] sm:$0xff]
    %v29 = vld [vmem:[%s0 + $0x58] sm:$0xff]
    %v30 = vld [vmem:[%s0 + $0x60] sm:$0xff]
    %v31 = vld [vmem:[%s0 + $0x68] sm:$0xff]
    %v32 = vld [vmem:[%s0 + $0x70] sm:$0xff]
    %v33 = vld [vmem:[%s0 + $0x78] sm:$0xff]
    %v34 = vld [vmem:[%s1] sm:$0xff]
    %v35 = vld [vmem:[%s1 + $0x8] sm:$0xff]
    %v36 = vld [vmem:[%s1 + $0x10] sm:$0xff]
    %v37 = vld [vmem:[%s1 + $0x18] sm:$0xff]
    %vm38 = vcmask 261120
    %v40 = vsel %vm38, %v18, 0
    %v43 = vsel %vm38, %v19, 0
    %v46 = vsel %vm38, %v20, 0
    %v49 = vsel %vm38, %v21, 0
    %v52 = vsel %vm38, %v22, 0
    %v55 = vsel %vm38, %v23, 0
    %v58 = vsel %vm38, %v24, 0
    %v61 = vsel %vm38, %v25, 0
    %v64 = vsel %vm38, %v26, 0
    %v67 = vsel %vm38, %v27, 0
    %v70 = vsel %vm38, %v28, 0
    %v73 = vsel %vm38, %v29, 0
    %v76 = vsel %vm38, %v30, 0
    %v79 = vsel %vm38, %v31, 0
    %v82 = vsel %vm38, %v32, 0
    %v85 = vsel %vm38, %v33, 0
    %87 = vmatprep.subr.mxu0 0.0
    %88 = vmatpush1.msra.mxu0 %v34
    %89 = vmatprep.subr.mxu0 0.0
    %90 = vmatpush1.msra.mxu0 %v35
    %91 = vmatprep.subr.mxu0 0.0
    %92 = vmatpush1.msra.mxu0 %v36
    %93 = vmatprep.subr.mxu0 0.0
    %94 = vmatpush1.msra.mxu0 %v37
    %95 = vmatprep.subr.mxu0 0.0
    %96 = vmatpush1.msra.mxu0 0.0
    %97 = vmatprep.subr.mxu0 0.0
    %98 = vmatpush1.msra.mxu0 0.0
    %99 = vmatprep.subr.mxu0 0.0
    %100 = vmatpush1.msra.mxu0 0.0
    %101 = vmatprep.subr.mxu0 0.0
    %102 = vmatpush1.msra.mxu0 0.0
    %103 = vmatprep.subr.mxu0 0.0
    %104 = vmatpush1.msra.mxu0 0.0
    %105 = vmatprep.subr.mxu0 0.0
    %106 = vmatpush1.msra.mxu0 0.0
    %107 = vmatprep.subr.mxu0 0.0
    %108 = vmatpush1.msra.mxu0 0.0
    %109 = vmatprep.subr.mxu0 0.0
    %110 = vmatpush1.msra.mxu0 0.0
    %111 = vmatprep.subr.mxu0 0.0
    %112 = vmatpush1.msra.mxu0 0.0
    %113 = vmatprep.subr.mxu0 0.0
    %114 = vmatpush1.msra.mxu0 0.0
    %115 = vmatprep.subr.mxu0 0.0
    %116 = vmatpush1.msra.mxu0 0.0
    %117 = vmatprep.subr.mxu0 0.0
    %118 = vmatpush1.msra.mxu0 0.0
    %119 = vmatprep.subr.mxu0 0.0
    %120 = vmatpush1.msra.mxu0 0.0
    %121 = vmatprep.subr.mxu0 0.0
    %122 = vmatpush1.msra.mxu0 0.0
    %123 = vmatprep.subr.mxu0 0.0
    %124 = vmatpush1.msra.mxu0 0.0
    %125 = vmatprep.subr.mxu0 0.0
    %126 = vmatpush1.msra.mxu0 0.0
    %127 = vmatprep.subr.mxu0 0.0
    %128 = vmatpush1.msra.mxu0 0.0
    %129 = vmatprep.subr.mxu0 0.0
    %130 = vmatpush1.msra.mxu0 0.0
    %131 = vmatprep.subr.mxu0 0.0
    %132 = vmatpush1.msra.mxu0 0.0
    %133 = vmatprep.subr.mxu0 0.0
    %134 = vmatpush1.msra.mxu0 0.0
    %135 = vmatprep.subr.mxu0 0.0
    %136 = vmatpush1.msra.mxu0 0.0
    %137 = vmatprep.subr.mxu0 0.0
    %138 = vmatpush1.msra.mxu0 0.0
    %139 = vmatprep.subr.mxu0 0.0
    %140 = vmatpush1.msra.mxu0 0.0
    %141 = vmatprep.subr.mxu0 0.0
    %142 = vmatpush1.msra.mxu0 0.0
    %143 = vmatprep.subr.mxu0 0.0
    %144 = vmatpush1.msra.mxu0 0.0
    %145 = vmatprep.subr.mxu0 0.0
    %146 = vmatpush1.msra.mxu0 0.0
    %147 = vmatprep.subr.mxu0 0.0
    %148 = vmatpush1.msra.mxu0 0.0
    %149 = vmatprep.subr.mxu0 0.0
    %150 = vmatpush1.msra.mxu0 0.0
    %151 = vmatprep.mubr.f32.mxu0 0.0
    %152 = vmatmul.mubr.f32.gmra.mrb[0].mxu0 %v40
    %v153 = vpop.f32.mrb[0].mxu0
    %v154 = vadd.f32 0.0, %v153
    %v155 = vpop.f32.mrb[0].mxu0
    %156 = vmatprep.mubr.f32.mxu0 0.0
    %157 = vmatmul.mubr.f32.gmra.mrb[0].mxu0 %v43
    %v158 = vpop.f32.mrb[0].mxu0
    %v159 = vadd.f32 0.0, %v158
    %v160 = vpop.f32.mrb[0].mxu0
    %161 = vmatprep.mubr.f32.mxu0 0.0
    %162 = vmatmul.mubr.f32.gmra.mrb[0].mxu0 %v46
    %v163 = vpop.f32.mrb[0].mxu0
    %v164 = vadd.f32 0.0, %v163
    %v165 = vpop.f32.mrb[0].mxu0
    %166 = vmatprep.mubr.f32.mxu0 0.0
    %167 = vmatmul.mubr.f32.gmra.mrb[0].mxu0 %v49
    %v168 = vpop.f32.mrb[0].mxu0
    %v169 = vadd.f32 0.0, %v168
    %v170 = vpop.f32.mrb[0].mxu0
    %171 = vmatprep.mubr.f32.mxu0 0.0
    %172 = vmatmul.mubr.f32.gmra.mrb[0].mxu0 %v52
    %v173 = vpop.f32.mrb[0].mxu0
    %v174 = vadd.f32 0.0, %v173
    %v175 = vpop.f32.mrb[0].mxu0
    %176 = vmatprep.mubr.f32.mxu0 0.0
    %177 = vmatmul.mubr.f32.gmra.mrb[0].mxu0 %v55
    %v178 = vpop.f32.mrb[0].mxu0
    %v179 = vadd.f32 0.0, %v178
    %v180 = vpop.f32.mrb[0].mxu0
    %181 = vmatprep.mubr.f32.mxu0 0.0
    %182 = vmatmul.mubr.f32.gmra.mrb[0].mxu0 %v58
    %v183 = vpop.f32.mrb[0].mxu0
    %v184 = vadd.f32 0.0, %v183
    %v185 = vpop.f32.mrb[0].mxu0
    %186 = vmatprep.mubr.f32.mxu0 0.0
    %187 = vmatmul.mubr.f32.gmra.mrb[0].mxu0 %v61
    %v188 = vpop.f32.mrb[0].mxu0
    %v189 = vadd.f32 0.0, %v188
    %v190 = vpop.f32.mrb[0].mxu0
    %191 = vmatprep.mubr.f32.mxu0 0.0
    %192 = vmatmul.mubr.f32.gmra.mrb[0].mxu0 %v64
    %v193 = vpop.f32.mrb[0].mxu0
    %v194 = vadd.f32 0.0, %v193
    %v195 = vpop.f32.mrb[0].mxu0
    %196 = vmatprep.mubr.f32.mxu0 0.0
    %197 = vmatmul.mubr.f32.gmra.mrb[0].mxu0 %v67
    %v198 = vpop.f32.mrb[0].mxu0
    %v199 = vadd.f32 0.0, %v198
    %v200 = vpop.f32.mrb[0].mxu0
    %201 = vmatprep.mubr.f32.mxu0 0.0
    %202 = vmatmul.mubr.f32.gmra.mrb[0].mxu0 %v70
    %v203 = vpop.f32.mrb[0].mxu0
    %v204 = vadd.f32 0.0, %v203
    %v205 = vpop.f32.mrb[0].mxu0
    %206 = vmatprep.mubr.f32.mxu0 0.0
    %207 = vmatmul.mubr.f32.gmra.mrb[0].mxu0 %v73
    %v208 = vpop.f32.mrb[0].mxu0
    %v209 = vadd.f32 0.0, %v208
    %v210 = vpop.f32.mrb[0].mxu0
    %211 = vmatprep.mubr.f32.mxu0 0.0
    %212 = vmatmul.mubr.f32.gmra.mrb[0].mxu0 %v76
    %v213 = vpop.f32.mrb[0].mxu0
    %v214 = vadd.f32 0.0, %v213
    %v215 = vpop.f32.mrb[0].mxu0
    %216 = vmatprep.mubr.f32.mxu0 0.0
    %217 = vmatmul.mubr.f32.gmra.mrb[0].mxu0 %v79
    %v218 = vpop.f32.mrb[0].mxu0
    %v219 = vadd.f32 0.0, %v218
    %v220 = vpop.f32.mrb[0].mxu0
    %221 = vmatprep.mubr.f32.mxu0 0.0
    %222 = vmatmul.mubr.f32.gmra.mrb[0].mxu0 %v82
    %v223 = vpop.f32.mrb[0].mxu0
    %v224 = vadd.f32 0.0, %v223
    %v225 = vpop.f32.mrb[0].mxu0
    %226 = vmatprep.mubr.f32.mxu0 0.0
    %227 = vmatmul.mubr.f32.gmra.mrb[0].mxu0 %v85
    %v228 = vpop.f32.mrb[0].mxu0
    %v229 = vadd.f32 0.0, %v228
    %v230 = vpop.f32.mrb[0].mxu0
    %231 = vdwg.mxu0
    %v232 = vadd.f32 %v154, %v159
    %v233 = vadd.f32 %v232, %v164
    %v234 = vadd.f32 %v233, %v169
    %v235 = vadd.f32 %v234, %v174
    %v236 = vadd.f32 %v235, %v179
    %v237 = vadd.f32 %v236, %v184
    %v238 = vadd.f32 %v237, %v189
    %v239 = vadd.f32 %v238, %v194
    %v240 = vadd.f32 %v239, %v199
    %v241 = vadd.f32 %v240, %v204
    %v242 = vadd.f32 %v241, %v209
    %v243 = vadd.f32 %v242, %v214
    %v244 = vadd.f32 %v243, %v219
    %v245 = vadd.f32 %v244, %v224
    %v246 = vadd.f32 %v245, %v229
    %v247 = vrot.slane %v246, 4
    %v248 = vadd.f32 %v246, %v247
    %v249 = vrot.slane %v248, 2
    %v250 = vadd.f32 %v248, %v249
    %v251 = vrot.slane %v250, 1
    %v252 = vadd.f32 %v250, %v251
    %v253 = vmul.f32 %v252, 0.0078125
    %v254 = vmul.f32 %v154, %v154
    %v255 = vmul.f32 %v159, %v159
    %v256 = vmul.f32 %v164, %v164
    %v257 = vmul.f32 %v169, %v169
    %v258 = vmul.f32 %v174, %v174
    %v259 = vmul.f32 %v179, %v179
    %v260 = vmul.f32 %v184, %v184
    %v261 = vmul.f32 %v189, %v189
    %v262 = vmul.f32 %v194, %v194
    %v263 = vmul.f32 %v199, %v199
    %v264 = vmul.f32 %v204, %v204
    %v265 = vmul.f32 %v209, %v209
    %v266 = vmul.f32 %v214, %v214
    %v267 = vmul.f32 %v219, %v219
    %v268 = vmul.f32 %v224, %v224
    %v269 = vmul.f32 %v229, %v229
    %v270 = vadd.f32 %v254, %v255
    %v271 = vadd.f32 %v270, %v256
    %v272 = vadd.f32 %v271, %v257
    %v273 = vadd.f32 %v272, %v258
    %v274 = vadd.f32 %v273, %v259
    %v275 = vadd.f32 %v274, %v260
    %v276 = vadd.f32 %v275, %v261
    %v277 = vadd.f32 %v276, %v262
    %v278 = vadd.f32 %v277, %v263
    %v279 = vadd.f32 %v278, %v264
    %v280 = vadd.f32 %v279, %v265
    %v281 = vadd.f32 %v280, %v266
    %v282 = vadd.f32 %v281, %v267
    %v283 = vadd.f32 %v282, %v268
    %v284 = vadd.f32 %v283, %v269
    %v285 = vrot.slane %v284, 4
    %v286 = vadd.f32 %v284, %v285
    %v287 = vrot.slane %v286, 2
    %v288 = vadd.f32 %v286, %v287
    %v289 = vrot.slane %v288, 1
    %v290 = vadd.f32 %v288, %v289
    %v291 = vmul.f32 %v290, 0.0078125
    %v292 = vmul.f32 %v253, %v253
    %v293 = vsub.f32 %v291, %v292
    %v294 = vmax.f32 %v293, 0.0
    %v295 = vld [vmem:[%s2] sm:$0x1]
    %v296 = vadd.f32 %v294, 1e-05
    %v297 = vrsqrt.pop %v296
    %v298 = vmul.f32 %v295, %v297
    %v299 = vsub.f32 %v154, %v253
    %v300 = vsub.f32 %v159, %v253
    %v301 = vsub.f32 %v164, %v253
    %v302 = vsub.f32 %v169, %v253
    %v303 = vsub.f32 %v174, %v253
    %v304 = vsub.f32 %v179, %v253
    %v305 = vsub.f32 %v184, %v253
    %v306 = vsub.f32 %v189, %v253
    %v307 = vsub.f32 %v194, %v253
    %v308 = vsub.f32 %v199, %v253
    %v309 = vsub.f32 %v204, %v253
    %v310 = vsub.f32 %v209, %v253
    %v311 = vsub.f32 %v214, %v253
    %v312 = vsub.f32 %v219, %v253
    %v313 = vsub.f32 %v224, %v253
    %v314 = vsub.f32 %v229, %v253
    %v316 = vlaneseq
    %v317 = vshrl.u32 %v316, 7
    %v318 = vsub.s32 0, %v317
    %v319 = vrot.slane %v298, %v318
    %v321 = vmul.f32 %v299, %v319
    %v322 = vmul.f32 %v300, %v319
    %v323 = vmul.f32 %v301, %v319
    %v324 = vmul.f32 %v302, %v319
    %v325 = vmul.f32 %v303, %v319
    %v326 = vmul.f32 %v304, %v319
    %v327 = vmul.f32 %v305, %v319
    %v328 = vmul.f32 %v306, %v319
    %v329 = vmul.f32 %v307, %v319
    %v330 = vmul.f32 %v308, %v319
    %v331 = vmul.f32 %v309, %v319
    %v332 = vmul.f32 %v310, %v319
    %v333 = vmul.f32 %v311, %v319
    %v334 = vmul.f32 %v312, %v319
    %v335 = vmul.f32 %v313, %v319
    %v336 = vmul.f32 %v314, %v319
    %v337 = vld [vmem:[%s3] sm:$0x1]
    %v339 = vlaneseq
    %v340 = vshrl.u32 %v339, 7
    %v341 = vsub.s32 0, %v340
    %v342 = vrot.slane %v337, %v341
    %v344 = vadd.f32 %v321, %v342
    %v345 = vadd.f32 %v322, %v342
    %v346 = vadd.f32 %v323, %v342
    %v347 = vadd.f32 %v324, %v342
    %v348 = vadd.f32 %v325, %v342
    %v349 = vadd.f32 %v326, %v342
    %v350 = vadd.f32 %v327, %v342
    %v351 = vadd.f32 %v328, %v342
    %v352 = vadd.f32 %v329, %v342
    %v353 = vadd.f32 %v330, %v342
    %v354 = vadd.f32 %v331, %v342
    %v355 = vadd.f32 %v332, %v342
    %v356 = vadd.f32 %v333, %v342
    %v357 = vadd.f32 %v334, %v342
    %v358 = vadd.f32 %v335, %v342
    %v359 = vadd.f32 %v336, %v342
    %v360 = vmax.f32 %v344, 0.0
    %v361 = vmax.f32 %v345, 0.0
    %v362 = vmax.f32 %v346, 0.0
    %v363 = vmax.f32 %v347, 0.0
    %v364 = vmax.f32 %v348, 0.0
    %v365 = vmax.f32 %v349, 0.0
    %v366 = vmax.f32 %v350, 0.0
    %v367 = vmax.f32 %v351, 0.0
    %v368 = vmax.f32 %v352, 0.0
    %v369 = vmax.f32 %v353, 0.0
    %v370 = vmax.f32 %v354, 0.0
    %v371 = vmax.f32 %v355, 0.0
    %v372 = vmax.f32 %v356, 0.0
    %v373 = vmax.f32 %v357, 0.0
    %v374 = vmax.f32 %v358, 0.0
    %v375 = vmax.f32 %v359, 0.0
    %376 = vst [vmem:[#allocation2] sm:$0xff] %v360
    %377 = vst [vmem:[#allocation2 + $0x8] sm:$0xff] %v361
    %378 = vst [vmem:[#allocation2 + $0x10] sm:$0xff] %v362
    %379 = vst [vmem:[#allocation2 + $0x18] sm:$0xff] %v363
    %380 = vst [vmem:[#allocation2 + $0x20] sm:$0xff] %v364
    %381 = vst [vmem:[#allocation2 + $0x28] sm:$0xff] %v365
    %382 = vst [vmem:[#allocation2 + $0x30] sm:$0xff] %v366
    %383 = vst [vmem:[#allocation2 + $0x38] sm:$0xff] %v367
    %384 = vst [vmem:[#allocation2 + $0x40] sm:$0xff] %v368
    %385 = vst [vmem:[#allocation2 + $0x48] sm:$0xff] %v369
    %386 = vst [vmem:[#allocation2 + $0x50] sm:$0xff] %v370
    %387 = vst [vmem:[#allocation2 + $0x58] sm:$0xff] %v371
    %388 = vst [vmem:[#allocation2 + $0x60] sm:$0xff] %v372
    %389 = vst [vmem:[#allocation2 + $0x68] sm:$0xff] %v373
    %390 = vst [vmem:[#allocation2 + $0x70] sm:$0xff] %v374
    %391 = vst [vmem:[#allocation2 + $0x78] sm:$0xff] %v375
    // Predicated region
    $region18: #{tpu_custom_call.1} parent=1 // pred_check
      _
    $region19: #{tpu_custom_call.1} parent=1 // pred_check_branch
      %393 = sbr.rel (0) target = $region21
    $region20: #{tpu_custom_call.1} parent=1 // pred_region
      %s395 = ssub.s32 2048, 2048
      %396 = vsyncadd [#allocation3], %s395
      %s397 = sshll.u32 [#allocation2], 4
      %s398 = int_to_ptr.vmem [resolvable:$true] %s397
      %403 = dma.vmem_to_hbm [thread:$0]  %s398, 2048, %s4, [#allocation3], 128, 128, 8
    $region21: #{tpu_custom_call.1} parent=1 // pred_fallthru
      _
    // Predicated region
    $region22: #{tpu_custom_call.1} parent=1 // pred_check
      _
    $region23: #{tpu_custom_call.1} parent=1 // pred_check_branch
      %405 = sbr.rel (0) target = $region25
    $region24: #{tpu_custom_call.1} parent=1 // pred_region
      %406 = dma.done [#allocation3], 2048
    $region25: #{tpu_custom_call.1} parent=1 // pred_fallthru
      _
    %407 = vsyncpa [#allocation3], 1

</llo_original>
